<compile_context>
chip_gen: v7x
topology: tpu7x:2x2x1
jax: 0.10.0
libtpu: 0.0.40
codegen_flags: <defaults>
</compile_context>

<pallas_src>
import functools

import jax
import jax.numpy as jnp
from jax.experimental import pallas as pl
from jax.experimental.pallas import tpu as pltpu

# ---------------------------------------------------------------------------
# Synthetic darknet cfg (embedded; replaces parse_cfd's file read).
# Covers every layer type the forward pass handles:
# convolutional / shortcut / route (1 and 2 layers) / upsample / yolo.
# ---------------------------------------------------------------------------
CFG = """
[net]
height=16
width=16
channels=3

[convolutional]
batch_normalize=1
filters=8
size=3
stride=1
pad=1
activation=leaky

[convolutional]
batch_normalize=1
filters=16
size=3
stride=2
pad=1
activation=leaky

[convolutional]
batch_normalize=1
filters=16
size=1
stride=1
pad=1
activation=leaky

[shortcut]
from=-2
activation=linear

[convolutional]
size=1
stride=1
pad=1
filters=18
activation=linear

[yolo]
mask=0,1
anchors=10,13,16,30,33,23
classes=4
num=3

[route]
layers=-3

[convolutional]
batch_normalize=1
filters=8
size=1
stride=1
pad=1
activation=leaky

[upsample]
stride=2

[route]
layers=-1,-9

[convolutional]
size=1
stride=1
pad=1
filters=9
activation=linear

[yolo]
mask=2
anchors=10,13,16,30,33,23
classes=4
num=3
"""


def parse_cfg_string(text):
    """String version of parse_cfd (no file I/O)."""
    lines = [l.strip() for l in text.split("\n")]
    lines = [l for l in lines if len(l) > 0 and l[0] != "#"]
    block, blocks = {}, []
    for line in lines:
        if line[0] == "[":
            if block:
                blocks.append(block)
                block = {}
            block["type"] = line[1:-1].rstrip()
        else:
            k, v = line.split("=")
            block[k.rstrip()] = v.lstrip()
    blocks.append(block)
    return blocks


# ---------------------------------------------------------------------------
# Tiling helpers
# ---------------------------------------------------------------------------
_TILE_M = 512   # lane-dim tile for the conv matmul / affine epilogue
_TILE_K = 512   # contraction-dim tile (K grid axis kicks in above this)
_BN_EPS = 1e-5


def _round_up(x, m):
    return ((x + m - 1) // m) * m


def _m_tiling(m):
    """Padded M and tile size (M maps to the 128-lane axis)."""
    if m <= _TILE_M:
        m_pad = _round_up(m, 128)
        return m_pad, m_pad
    return _round_up(m, _TILE_M), _TILE_M


def _k_tiling(k):
    """Padded K and tile size for the contraction axis (bf16-friendly)."""
    if k <= _TILE_K:
        k_pad = _round_up(k, 16)
        return k_pad, k_pad
    return _round_up(k, _TILE_K), _TILE_K


# ---------------------------------------------------------------------------
# Pallas kernels
# ---------------------------------------------------------------------------
def _conv_bias_act_kernel(w_ref, p_ref, s_ref, b_ref, o_ref, acc_ref, *, leaky):
    """(Cout_pad, tile_k) @ (tile_k, tile_m), accumulated over the K grid axis.

    Bias/affine + LeakyReLU epilogue fused at the last K step.  Output block
    is (Cout_pad, tile_m): the big M axis stays lane-dense.
    """
    k = pl.program_id(1)

    @pl.when(k == 0)
    def _init():
        acc_ref[...] = jnp.zeros_like(acc_ref)

    acc_ref[...] += jnp.dot(w_ref[...], p_ref[...],
                            preferred_element_type=jnp.float32)

    @pl.when(k == pl.num_programs(1) - 1)
    def _finalize():
        y = acc_ref[...] * s_ref[...] + b_ref[...]
        if leaky:
            y = jnp.where(y > 0, y, 0.1 * y)
        o_ref[...] = y


def _conv_raw_stats_kernel(w_ref, p_ref, o_ref, stats_ref, acc_ref):
    """Matmul-only conv for the train-mode BN path.

    Emits the raw f32 conv output plus per-M-tile [sum, sum_sq] so batch
    statistics stay exact across M tiles (single-pass E[x] / E[x^2], no
    per-tile mean/var divergence).
    """
    k = pl.program_id(1)

    @pl.when(k == 0)
    def _init():
        acc_ref[...] = jnp.zeros_like(acc_ref)

    acc_ref[...] += jnp.dot(w_ref[...], p_ref[...],
                            preferred_element_type=jnp.float32)

    @pl.when(k == pl.num_programs(1) - 1)
    def _finalize():
        acc = acc_ref[...]
        o_ref[...] = acc
        s1 = jnp.sum(acc, axis=1, keepdims=True)          # (Cout_pad, 1)
        s2 = jnp.sum(acc * acc, axis=1, keepdims=True)    # (Cout_pad, 1)
        stats_ref[...] = jnp.concatenate([s1, s2], axis=1)[None]   # (1, Cout_pad, 2)


def _affine_act_kernel(x_ref, s_ref, b_ref, o_ref, *, leaky):
    """y = x * scale + shift (per output channel) + optional LeakyReLU."""
    y = x_ref[...] * s_ref[...] + b_ref[...]
    if leaky:
        y = jnp.where(y > 0, y, 0.1 * y)
    o_ref[...] = y


def _yolo_kernel(p_ref, anc_ref, o_ref, *, stride, grid_size, num_anchors):
    """YOLO predict_transform on a (B, D, M) block; M = G*G*A is lane-dense.

    Grid offsets are built in-kernel (no HBM aux tensors); exp() touches only
    the two w/h rows (EUP thrift; avoids inf on large obj/class logits).
    """
    p = p_ref[...]                                        # (B, D, M) f32
    m = jax.lax.broadcasted_iota(jnp.int32, (1, 1, p.shape[2]), 2)
    g = m // num_anchors                                  # spatial cell index
    cx = (g % grid_size).astype(jnp.float32)
    cy = (g // grid_size).astype(jnp.float32)
    off = jnp.concatenate([cx, cy], axis=1)               # (1, 2, M)

    xy = (jax.nn.sigmoid(p[:, 0:2, :]) + off) * stride
    wh = jnp.exp(p[:, 2:4, :]) * anc_ref[...][None] * stride
    rest = jax.nn.sigmoid(p[:, 4:, :])
    o_ref[...] = jnp.concatenate([xy, wh, rest], axis=1)


# ---------------------------------------------------------------------------
# Pallas wrappers
# ---------------------------------------------------------------------------
def _conv_grid(w_pad, p_pad):
    cout_pad, k_pad = w_pad.shape
    _, m_pad = p_pad.shape
    tile_m = min(m_pad, _TILE_M)
    tile_k = min(k_pad, _TILE_K)
    num_m = m_pad // tile_m
    num_k = k_pad // tile_k

    w_spec = pl.BlockSpec((cout_pad, tile_k), lambda i, k: (0, k))
    p_spec = pl.BlockSpec((tile_k, tile_m), lambda i, k: (k, i))
    vec_spec = pl.BlockSpec((cout_pad, 1), lambda i, k: (0, 0))
    o_spec = pl.BlockSpec((cout_pad, tile_m), lambda i, k: (0, i))

    cparams = pltpu.CompilerParams(
        # M tiles are independent -> shard across v7x's 2 TensorCores;
        # K is the reduction axis (accumulator resident) -> arbitrary.
        dimension_semantics=("parallel", "arbitrary"),
        vmem_limit_bytes=32 * 1024 * 1024,   # explicit; fits v7x's 64 MiB VMEM
    )
    cost = pl.CostEstimate(
        flops=2 * cout_pad * k_pad * m_pad,
        transcendentals=0,
        bytes_accessed=w_pad.size * 2 + p_pad.size * 2 + cout_pad * m_pad * 4,
    )
    scratch = [pltpu.VMEM((cout_pad, tile_m), jnp.float32)]
    return ((num_m, num_k), (w_spec, p_spec, vec_spec, o_spec),
            cparams, cost, scratch, (cout_pad, m_pad, num_m))


def conv_matmul_fused(p_pad, w_pad, scale, shift, *, leaky):
    """Conv as (Cout_pad, K_pad) @ (K_pad, M_pad) with fused bias + LeakyReLU."""
    (grid, (w_spec, p_spec, vec_spec, o_spec), cparams, cost, scratch,
     (cout_pad, m_pad, _)) = _conv_grid(w_pad, p_pad)
    return pl.pallas_call(
        functools.partial(_conv_bias_act_kernel, leaky=leaky),
        out_shape=jax.ShapeDtypeStruct((cout_pad, m_pad), jnp.float32),
        grid=grid,
        in_specs=[w_spec, p_spec, vec_spec, vec_spec],
        out_specs=o_spec,
        scratch_shapes=scratch,
        compiler_params=cparams,
        cost_estimate=cost,
    )(w_pad, p_pad, scale, shift)


def conv_matmul_raw_stats(p_pad, w_pad):
    """Conv matmul that also emits per-M-tile [sum, sum_sq] for exact BN stats."""
    (grid, (w_spec, p_spec, _, o_spec), cparams, cost, scratch,
     (cout_pad, m_pad, num_m)) = _conv_grid(w_pad, p_pad)
    return pl.pallas_call(
        _conv_raw_stats_kernel,
        out_shape=(jax.ShapeDtypeStruct((cout_pad, m_pad), jnp.float32),
                   jax.ShapeDtypeStruct((num_m, cout_pad, 2), jnp.float32)),
        grid=grid,
        in_specs=[w_spec, p_spec],
        out_specs=(o_spec,
                   pl.BlockSpec((1, cout_pad, 2), lambda i, k: (i, 0, 0))),
        scratch_shapes=scratch,
        compiler_params=cparams,
        cost_estimate=cost,
    )(w_pad, p_pad)


def affine_act(x_pad, scale, shift, *, leaky):
    """Tiled per-channel affine + LeakyReLU over a (Cout_pad, M_pad) tensor."""
    cout_pad, m_pad = x_pad.shape
    tile_m = min(m_pad, _TILE_M)
    num_m = m_pad // tile_m
    return pl.pallas_call(
        functools.partial(_affine_act_kernel, leaky=leaky),
        out_shape=jax.ShapeDtypeStruct((cout_pad, m_pad), jnp.float32),
        grid=(num_m,),
        in_specs=[pl.BlockSpec((cout_pad, tile_m), lambda i: (0, i)),
                  pl.BlockSpec((cout_pad, 1), lambda i: (0, 0)),
                  pl.BlockSpec((cout_pad, 1), lambda i: (0, 0))],
        out_specs=pl.BlockSpec((cout_pad, tile_m), lambda i: (0, i)),
        compiler_params=pltpu.CompilerParams(
            dimension_semantics=("parallel",)),
    )(x_pad, scale, shift)


# ---------------------------------------------------------------------------
# Glue: channel-major im2col and the YOLO predict_transform wrapper
# ---------------------------------------------------------------------------
def im2col_cm(x, k, stride, pad):
    """x: (C, N, H, W) -> patches (C*k*k, N*OH*OW).

    K-order matches torch Conv2d weight.reshape(Cout, Cin*KH*KW); the big
    M = N*OH*OW axis is the trailing (lane) axis.  Channel-major layout means
    no transpose is needed after slicing.
    """
    C, N, H, W = x.shape
    OH = (H + 2 * pad - k) // stride + 1
    OW = (W + 2 * pad - k) // stride + 1
    if k == 1 and pad == 0:
        p = x[:, :, ::stride, ::stride].reshape(C, N * OH * OW)
        return p, OH, OW
    if pad:
        x = jnp.pad(x, ((0, 0), (0, 0), (pad, pad), (pad, pad)))
    # TODO(synk): for real resolutions, form the k*k shifted windows inside the
    # conv kernel (memory_space=pl.ANY + make_async_copy) instead of
    # materializing a k^2-duplicated patch matrix in HBM.
    cols = [x[:, :, i:i + stride * OH:stride, j:j + stride * OW:stride]
            for i in range(k) for j in range(k)]
    p = jnp.stack(cols, axis=1).reshape(C * k * k, N * OH * OW)
    return p, OH, OW


def predict_transform(x_cm, inp_dim, anchors, num_classes):
    """x_cm: (A*D, N, G, G) channel-major conv output -> (B, G*G*A, D) dets."""
    C, N, G, _ = x_cm.shape
    A = len(anchors)
    D = 5 + num_classes
    M = G * G * A
    stride = inp_dim // G

    # (A*D, N, G, G) -> (B, D, M) with torch row order m = g*A + a.  Only this
    # head-level permute touches torch order; the kernel itself is lane-dense.
    p = x_cm.reshape(A, D, N, G * G).transpose(2, 1, 3, 0).reshape(N, D, M)

    # Anchors as a tiny (2, M) array (w row, h row), column m -> anchor m % A.
    anc = jnp.array([[a[0] / stride for a in anchors],
                     [a[1] / stride for a in anchors]], jnp.float32)
    anc = jnp.tile(anc, (1, G * G))

    kernel = functools.partial(_yolo_kernel, stride=float(stride),
                               grid_size=G, num_anchors=A)
    out = pl.pallas_call(
        kernel,
        out_shape=jax.ShapeDtypeStruct((N, D, M), jnp.float32),
        grid=(1,),
        in_specs=[pl.BlockSpec((N, D, M), lambda i: (0, 0, 0)),
                  pl.BlockSpec((2, M), lambda i: (0, 0))],
        out_specs=pl.BlockSpec((N, D, M), lambda i: (0, 0, 0)),
    )(p, anc)
    return jnp.transpose(out, (0, 2, 1))   # (B, M, D) torch detection order


# ---------------------------------------------------------------------------
# Darknet (JAX version of the PyTorch module)
# ---------------------------------------------------------------------------
class Darknet:
    def __init__(self, cfg_text, key):
        self.blocks = parse_cfg_string(cfg_text)
        self.net_info = self.blocks[0]
        self.layers = []
        pre_filters = 3
        output_filters = []
        filters = pre_filters
        for index, x in enumerate(self.blocks[1:]):
            layer = {"type": x["type"]}
            if x["type"] == "convolutional":
                bn = int(x.get("batch_normalize", 0))
                filters = int(x["filters"])
                ksize = int(x["size"])
                stride = int(x["stride"])
                pad = (ksize - 1) // 2 if int(x["pad"]) else 0
                kk = jax.random.fold_in(key, index)
                kw, kb, kg = jax.random.split(kk, 3)
                # deterministic synthetic weights (replaces load_weights)
                w = jax.random.normal(kw, (filters, pre_filters, ksize, ksize),
                                      jnp.float32) * 0.05
                K = pre_filters * ksize * ksize
                cout_pad = _round_up(filters, 8)
                k_pad, _ = _k_tiling(K)
                w_pad = jnp.zeros((cout_pad, k_pad), jnp.float32)
                w_pad = w_pad.at[:filters, :K].set(w.reshape(filters, K))
                layer.update(dict(
                    w_pad=w_pad.astype(jnp.bfloat16),   # bf16 MXU inputs
                    cout=filters, cout_pad=cout_pad, K=K,
                    ksize=ksize, stride=stride, pad=pad,
                    use_bn=bool(bn), leaky=(x["activation"] == "leaky")))
                if bn:
                    gamma = 1.0 + 0.1 * jax.random.normal(kg, (filters, 1), jnp.float32)
                    beta = 0.1 * jax.random.normal(kb, (filters, 1), jnp.float32)
                    layer["gamma"] = jnp.zeros((cout_pad, 1), jnp.float32).at[:filters].set(gamma)
                    layer["beta"] = jnp.zeros((cout_pad, 1), jnp.float32).at[:filters].set(beta)
                else:
                    bias = 0.1 * jax.random.normal(kb, (filters, 1), jnp.float32)
                    layer["scale"] = jnp.ones((cout_pad, 1), jnp.float32)
                    layer["shift"] = jnp.zeros((cout_pad, 1), jnp.float32).at[:filters].set(bias)
            elif x["type"] == "upsample":
                pass
            elif x["type"] == "route":
                parts = x["layers"].split(",")
                start = int(parts[0])
                end = int(parts[1]) if len(parts) > 1 else 0
                if start > 0:
                    start -= index
                if end > 0:
                    end -= index
                layer["layers"] = [start] + ([end] if len(parts) > 1 else [])
                if end < 0:
                    filters = output_filters[index + start] + output_filters[index + end]
                else:
                    filters = output_filters[index + start]
            elif x["type"] == "shortcut":
                layer["from"] = int(x["from"])
            elif x["type"] == "yolo":
                mask = [int(m) for m in x["mask"].split(",")]
                anchors = [int(a) for a in x["anchors"].split(",")]
                anchors = [(anchors[i], anchors[i + 1]) for i in range(0, len(anchors), 2)]
                layer["anchors"] = [anchors[m] for m in mask]
                layer["num_classes"] = int(x["classes"])
            self.layers.append(layer)
            pre_filters = filters
            output_filters.append(filters)

    # -- convolution (+ BN + LeakyReLU) --------------------------------------
    def _conv(self, x, layer):
        C, N, H, W = x.shape
        patches, OH, OW = im2col_cm(x, layer["ksize"], layer["stride"], layer["pad"])
        K, M = patches.shape
        k_pad = layer["w_pad"].shape[1]
        m_pad, _ = _m_tiling(M)
        p_pad = jnp.pad(patches, ((0, k_pad - K), (0, m_pad - M))).astype(jnp.bfloat16)
        cout, cout_pad = layer["cout"], layer["cout_pad"]

        if layer["use_bn"]:
            # nn.BatchNorm2d in (default) training mode: biased batch stats
            # over (N, H, W) per channel == over the M lanes per row.  Exact
            # under M tiling: kernel emits per-tile sum / sum_sq, tiny
            # cross-tile reduction + scale/shift folding happens here, then a
            # second tiled Pallas kernel applies the affine + LeakyReLU.
            raw, stats = conv_matmul_raw_stats(p_pad, layer["w_pad"])
            sums = jnp.sum(stats[:, :, 0], axis=0)[:, None]    # (Cout_pad, 1)
            sqs = jnp.sum(stats[:, :, 1], axis=0)[:, None]
            mean = sums / float(M)                             # padded lanes are 0
            var = jnp.maximum(sqs / float(M) - mean * mean, 0.0)
            scale = layer["gamma"] * jax.lax.rsqrt(var + _BN_EPS)
            shift = layer["beta"] - mean * scale
            y = affine_act(raw, scale, shift, leaky=layer["leaky"])
        else:
            y = conv_matmul_fused(p_pad, layer["w_pad"], layer["scale"],
                                  layer["shift"], leaky=layer["leaky"])
        return y[:cout, :M].reshape(cout, N, OH, OW)

    # -- forward --------------------------------------------------------------
    def forward(self, x_nchw):
        # Internal activation layout: channel-major (C, N, H, W) so the conv
        # output (Cout, N*OH*OW) feeds the next layer directly (no per-layer
        # NCHW<->NHWC transposes) and M stays on the lane axis everywhere.
        x = jnp.transpose(x_nchw, (1, 0, 2, 3))
        outputs = {}
        detections = None
        for i, layer in enumerate(self.layers):
            t = layer["type"]
            if t == "convolutional":
                x = self._conv(x, layer)
            elif t == "upsample":
                # nn.Upsample(scale_factor=2, mode='nearest') -- pure data movement
                x = jnp.repeat(jnp.repeat(x, 2, axis=2), 2, axis=3)
            elif t == "route":
                ls = layer["layers"]
                if len(ls) == 1:
                    x = outputs[i + ls[0]]
                else:
                    x = jnp.concatenate([outputs[i + ls[0]], outputs[i + ls[1]]], axis=0)
            elif t == "shortcut":
                # Plain-JAX add (per perf review): XLA fuses it with the next
                # layer's im2col / bf16 cast; a standalone pallas_call add for
                # an 8 KiB tensor only pays launch + pipeline overhead.
                x = outputs[i - 1] + outputs[i + layer["from"]]
            elif t == "yolo":
                inp_dim = int(self.net_info["height"])
                det = predict_transform(x, inp_dim, layer["anchors"],
                                        layer["num_classes"])
                detections = det if detections is None else jnp.concatenate(
                    [detections, det], axis=1)
                x = det
            outputs[i] = x
        return detections


if __name__ == "__main__":
    key = jax.random.PRNGKey(0)
    k_param, k_in = jax.random.split(key)
    net = Darknet(CFG, k_param)
    x = jax.random.normal(k_in, (2, 3, 16, 16), jnp.float32)  # NCHW, 3 input channels
    det = net.forward(x)
    det = jax.block_until_ready(det)
    # yolo head 1: 8x8 grid, 2 anchors ; yolo head 2: 16x16 grid, 1 anchor ; D = 5+4
    assert det.shape == (2, 8 * 8 * 2 + 16 * 16 * 1, 9), det.shape
    assert bool(jnp.all(jnp.isfinite(det)))
    print("KERNEL_OK")
</pallas_src>

<mosaic_0001>
module attributes {stable_mosaic.version = 11 : i64} {
  func.func @_conv_raw_stats_kernel(%arg0: i32, %arg1: i32, %arg2: memref<8x32xbf16, #tpu.memory_space<vmem>>, %arg3: memref<32x512xbf16, #tpu.memory_space<vmem>>, %arg4: memref<8x512xf32, #tpu.memory_space<vmem>>, %arg5: memref<1x8x2xf32, #tpu.memory_space<vmem>>, %arg6: memref<8x512xf32, #tpu.memory_space<vmem>>) attributes {dimension_semantics = [#tpu.dimension_semantics<parallel>, #tpu.dimension_semantics<arbitrary>], iteration_bounds = array<i64: 1, 1>, scalar_prefetch = 0 : i64, scratch_operands = 1 : i64, tpu.core_type = #tpu.core_type<tc>, window_params = [{transform_indices = @transform_0, window_bounds = array<i64: 8, 32>}, {transform_indices = @transform_1, window_bounds = array<i64: 32, 512>}, {transform_indices = @transform_2, window_bounds = array<i64: 8, 512>}, {transform_indices = @transform_3, window_bounds = array<i64: 1, 8, 2>}]} {
    %c0_i32 = arith.constant 0 : i32
    %0 = arith.cmpi eq, %arg1, %c0_i32 : i32
    %1 = arith.extui %0 : i1 to i32
    %c0_i32_0 = arith.constant 0 : i32
    %2 = arith.cmpi ne, %1, %c0_i32_0 : i32
    scf.if %2 {
      %cst_10 = arith.constant 0.000000e+00 : f32
      %12 = vector.broadcast %cst_10 : f32 to vector<8x512xf32>
      %c0_11 = arith.constant 0 : index
      %c0_12 = arith.constant 0 : index
      %13 = vector.load %arg6[%c0_11, %c0_12] : memref<8x512xf32, #tpu.memory_space<vmem>>, vector<8x512xf32>
      tpu.vector_store %arg6[%c0_11, %c0_12], %12 {strides = array<i32>} : memref<8x512xf32, #tpu.memory_space<vmem>>, vector<8x512xf32>,
    } else {
    }
    %c0 = arith.constant 0 : index
    %c0_1 = arith.constant 0 : index
    %3 = vector.load %arg6[%c0, %c0_1] : memref<8x512xf32, #tpu.memory_space<vmem>>, vector<8x512xf32>
    %c0_2 = arith.constant 0 : index
    %c0_3 = arith.constant 0 : index
    %4 = vector.load %arg2[%c0_2, %c0_3] : memref<8x32xbf16, #tpu.memory_space<vmem>>, vector<8x32xbf16>
    %c0_4 = arith.constant 0 : index
    %c0_5 = arith.constant 0 : index
    %5 = vector.load %arg3[%c0_4, %c0_5] : memref<32x512xbf16, #tpu.memory_space<vmem>>, vector<32x512xbf16>
    %cst = arith.constant dense<0.000000e+00> : vector<8x512xf32>
    %6 = tpu.matmul %4, %5, %cst {dimension_numbers = #tpu.dot_dimension_numbers<[1], [0], [0], [1], [0, 0, 1, 1], [], []>} : vector<8x32xbf16>, vector<32x512xbf16>, vector<8x512xf32> -> vector<8x512xf32>
    %7 = arith.addf %3, %6 : vector<8x512xf32>
    %c0_6 = arith.constant 0 : index
    %c0_7 = arith.constant 0 : index
    %8 = vector.load %arg6[%c0_6, %c0_7] : memref<8x512xf32, #tpu.memory_space<vmem>>, vector<8x512xf32>
    tpu.vector_store %arg6[%c0_6, %c0_7], %7 {strides = array<i32>} : memref<8x512xf32, #tpu.memory_space<vmem>>, vector<8x512xf32>,
    %c0_i32_8 = arith.constant 0 : i32
    %9 = arith.cmpi eq, %arg1, %c0_i32_8 : i32
    %10 = arith.extui %9 : i1 to i32
    %c0_i32_9 = arith.constant 0 : i32
    %11 = arith.cmpi ne, %10, %c0_i32_9 : i32
    scf.if %11 {
      %c0_10 = arith.constant 0 : index
      %c0_11 = arith.constant 0 : index
      %12 = vector.load %arg6[%c0_10, %c0_11] : memref<8x512xf32, #tpu.memory_space<vmem>>, vector<8x512xf32>
      %c0_12 = arith.constant 0 : index
      %c0_13 = arith.constant 0 : index
      %13 = vector.load %arg4[%c0_12, %c0_13] : memref<8x512xf32, #tpu.memory_space<vmem>>, vector<8x512xf32>
      tpu.vector_store %arg4[%c0_12, %c0_13], %12 {strides = array<i32>} : memref<8x512xf32, #tpu.memory_space<vmem>>, vector<8x512xf32>,
      %cst_14 = arith.constant dense<0.000000e+00> : vector<8xf32>
      %14 = vector.multi_reduction <add>, %12, %cst_14 [1] : vector<8x512xf32> to vector<8xf32>
      %15 = vector.shape_cast %14 : vector<8xf32> to vector<8x1xf32>
      %16 = arith.mulf %12, %12 : vector<8x512xf32>
      %cst_15 = arith.constant dense<0.000000e+00> : vector<8xf32>
      %17 = vector.multi_reduction <add>, %16, %cst_15 [1] : vector<8x512xf32> to vector<8xf32>
      %18 = vector.shape_cast %17 : vector<8xf32> to vector<8x1xf32>
      %19 = tpu.concatenate %15, %18 in 1 : vector<8x1xf32>, vector<8x1xf32> -> vector<8x2xf32>
      %20 = vector.shape_cast %19 : vector<8x2xf32> to vector<1x8x2xf32>
      %c0_16 = arith.constant 0 : index
      %c0_17 = arith.constant 0 : index
      %c0_18 = arith.constant 0 : index
      %21 = vector.load %arg5[%c0_16, %c0_17, %c0_18] : memref<1x8x2xf32, #tpu.memory_space<vmem>>, vector<1x8x2xf32>
      tpu.vector_store %arg5[%c0_16, %c0_17, %c0_18], %20 {strides = array<i32>} : memref<1x8x2xf32, #tpu.memory_space<vmem>>, vector<1x8x2xf32>,
    } else {
    }
    return
  }
  func.func @transform_0(%arg0: i32, %arg1: i32) -> (i32, i32) {
    %c0_i32 = arith.constant 0 : i32
    %c0_i32_0 = arith.constant 0 : i32
    return %c0_i32, %arg1 : i32, i32
  }
  func.func @transform_1(%arg0: i32, %arg1: i32) -> (i32, i32) {
    %c0_i32 = arith.constant 0 : i32
    return %arg1, %arg0 : i32, i32
  }
  func.func @transform_2(%arg0: i32, %arg1: i32) -> (i32, i32) {
    %c0_i32 = arith.constant 0 : i32
    %c0_i32_0 = arith.constant 0 : i32
    return %c0_i32, %arg0 : i32, i32
  }
  func.func @transform_3(%arg0: i32, %arg1: i32) -> (i32, i32, i32) {
    %c0_i32 = arith.constant 0 : i32
    %c0_i32_0 = arith.constant 0 : i32
    %c0_i32_1 = arith.constant 0 : i32
    return %arg0, %c0_i32, %c0_i32_0 : i32, i32, i32
  }
}

</mosaic_0001>

<llo_original>
// kernel: tpu_custom_call.1
$region0: #{tpu_custom_call.1}
  #allocation0 [shape = 'u32[]', space=smem, size = 0x4, offset = 0x4, fixed_abs, tag = 'smem constant byte address 0x4 - core index']
  #allocation1 [shape = 'u32[144,128]{1,0:T(1,128)}', space=vmem, size = 0x12000, scoped, tag = 'internal scratch']
  #allocation2 [shape = 'f32[8,512]{1,0:T(8,128)}', space=vmem, size = 0x4000, scoped, tag = 'scratch operand']
  %s0 = inlined_call_operand.hbm [shape: bf16[8,32], index: 0, kind: input, shape index: {}]
  %s1 = inlined_call_operand.hbm [shape: bf16[32,512], index: 1, kind: input, shape index: {}]
  %s2 = inlined_call_operand.hbm [shape: f32[8,512], index: 2, kind: output, shape index: {0}]
  %s3 = inlined_call_operand.vmem [shape: f32[1,8,2], index: 3, kind: output, shape index: {1}]
  %4 = xla_tuple %s2, %s3
  %s5 = sld [smem:[#allocation0]]
  $region42: #{tpu_custom_call.1} parent=0
    _
  %s7 = ssub.s32 1, %s5
  %s8 = scalar_select 0, %s7, %s5
  $region1: #{tpu_custom_call.1} parent=0
    #allocation3 [shape = 'u8[2048]{0}', space=vmem, size = 0x800, scoped, tag = 'input window, operand 0, single buffered']
    #allocation4 [shape = 's32[1]{0}', space=sflag, size = 0x4, scoped, tag = 'scoped memory for tpu_custom_call.1']
    #allocation5 [shape = 's32[1]{0}', space=sflag, size = 0x4, scoped, tag = 'scoped memory for tpu_custom_call.1']
    #allocation6 [shape = 'u8[32768]{0}', space=vmem, size = 0x8000, scoped, tag = 'input window, operand 1, single buffered']
    #allocation7 [shape = 's32[1]{0}', space=sflag, size = 0x4, scoped, tag = 'scoped memory for tpu_custom_call.1']
    #allocation8 [shape = 'u8[16384]{0}', space=vmem, size = 0x4000, scoped, tag = 'output window, operand 0, single buffered']
    %9 = vsyncpa [#allocation4], 0
    %10 = vsyncpa [#allocation7], 0
    %11 = vsyncpa [#allocation5], 0
    // Predicated region
    $region2: #{tpu_custom_call.1} parent=1 // pred_check
      _
    $region3: #{tpu_custom_call.1} parent=1 // pred_check_branch
      %13 = sbr.rel (0) target = $region5
    $region4: #{tpu_custom_call.1} parent=1 // pred_region
      %s15 = ssub.s32 64, 64
      %16 = vsyncadd [#allocation4], %s15
      %s18 = sshll.u32 [#allocation3], 4
      %s19 = int_to_ptr.vmem [resolvable:$true] %s18
      %21 = dma.hbm_to_vmem [thread:$0]  %s0, 64, %s19, [#allocation4]
    $region5: #{tpu_custom_call.1} parent=1 // pred_fallthru
      _
    // Predicated region
    $region6: #{tpu_custom_call.1} parent=1 // pred_check
      _
    $region7: #{tpu_custom_call.1} parent=1 // pred_check_branch
      %23 = sbr.rel (0) target = $region9
    $region8: #{tpu_custom_call.1} parent=1 // pred_region
      %s25 = ssub.s32 1024, 1024
      %26 = vsyncadd [#allocation7], %s25
      %s27 = sshll.u32 [#allocation6], 4
      %s28 = int_to_ptr.vmem [resolvable:$true] %s27
      %33 = dma.hbm_to_vmem [thread:$0]  %s1, 1024, %s28, [#allocation7], 256, 256, 16
    $region9: #{tpu_custom_call.1} parent=1 // pred_fallthru
      _
    // Predicated region
    $region10: #{tpu_custom_call.1} parent=1 // pred_check
      _
    $region11: #{tpu_custom_call.1} parent=1 // pred_check_branch
      %35 = sbr.rel (0) target = $region13
    $region12: #{tpu_custom_call.1} parent=1 // pred_region
      %36 = dma.done [#allocation4], 64
    $region13: #{tpu_custom_call.1} parent=1 // pred_fallthru
      _
    // Predicated region
    $region14: #{tpu_custom_call.1} parent=1 // pred_check
      _
    $region15: #{tpu_custom_call.1} parent=1 // pred_check_branch
      %38 = sbr.rel (0) target = $region17
    $region16: #{tpu_custom_call.1} parent=1 // pred_region
      %39 = dma.done [#allocation7], 1024
    $region17: #{tpu_custom_call.1} parent=1 // pred_fallthru
      _
    %p41 = scmp.eq.s32.totalorder 0, 0
    // Predicated region
    $region18: #{tpu_custom_call.1} parent=1 // pred_check
      %p42 = pneg %p41
    $region19: #{tpu_custom_call.1} parent=1 // pred_check_branch
      %44 = sbr.rel (%p42) target = $region21
    $region20: #{tpu_custom_call.1} parent=1 // pred_region
      %45 = vst [vmem:[#allocation2] sm:$0xff] 0.0
      %46 = vst [vmem:[#allocation2 + $0x8] sm:$0xff] 0.0
      %47 = vst [vmem:[#allocation2 + $0x10] sm:$0xff] 0.0
      %48 = vst [vmem:[#allocation2 + $0x18] sm:$0xff] 0.0
    $region21: #{tpu_custom_call.1} parent=1 // pred_fallthru
      _
    %v49 = vld [vmem:[#allocation2] sm:$0xff]
    %v50 = vld [vmem:[#allocation2 + $0x8] sm:$0xff]
    %v51 = vld [vmem:[#allocation2 + $0x10] sm:$0xff]
    %v52 = vld [vmem:[#allocation2 + $0x18] sm:$0xff]
    %v53 = vld [vmem:[#allocation3] sm:$0xf]
    %v54 = vld [vmem:[#allocation6] sm:$0xff]
    %v55 = vld [vmem:[#allocation6 + $0x8] sm:$0xff]
    %v56 = vld [vmem:[#allocation6 + $0x10] sm:$0xff]
    %v57 = vld [vmem:[#allocation6 + $0x18] sm:$0xff]
    %v58 = vld [vmem:[#allocation6 + $0x20] sm:$0xff]
    %v59 = vld [vmem:[#allocation6 + $0x28] sm:$0xff]
    %v60 = vld [vmem:[#allocation6 + $0x30] sm:$0xff]
    %v61 = vld [vmem:[#allocation6 + $0x38] sm:$0xff]
    %v70 = vunpack.c.l.b16 %v54
    %v71 = vunpack.c.h.b16 %v54
    %v72 = vunpack.c.l.b16 %v55
    %v73 = vunpack.c.h.b16 %v55
    %v74 = vunpack.c.l.b16 %v56
    %v75 = vunpack.c.h.b16 %v56
    %v76 = vunpack.c.l.b16 %v57
    %v77 = vunpack.c.h.b16 %v57
    %v78 = vunpack.c.l.b16 %v58
    %v79 = vunpack.c.h.b16 %v58
    %v80 = vunpack.c.l.b16 %v59
    %v81 = vunpack.c.h.b16 %v59
    %v82 = vunpack.c.l.b16 %v60
    %v83 = vunpack.c.h.b16 %v60
    %v84 = vunpack.c.l.b16 %v61
    %v85 = vunpack.c.h.b16 %v61
    %v86 = vpack.c.b16 %v74, %v70
    %v87 = vpack.c.b16 %v75, %v71
    %v88 = vpack.c.b16 %v76, %v72
    %v89 = vpack.c.b16 %v77, %v73
    %v90 = vpack.c.b16 %v82, %v78
    %v91 = vpack.c.b16 %v83, %v79
    %v92 = vpack.c.b16 %v84, %v80
    %v93 = vpack.c.b16 %v85, %v81
    %vm102 = vcmask 261120
    %v104 = vsel %vm102, %v53, 0
    %106 = vmatprep.subr.bf16.mxu0 %v87
    %107 = vmatpush1.bf16.msra.mxu0 %v86
    %108 = vmatprep.subr.bf16.mxu0 %v91
    %109 = vmatpush1.bf16.msra.mxu0 %v90
    %110 = vmatprep.subr.bf16.mxu0 0
    %111 = vmatpush1.bf16.msra.mxu0 0
    %112 = vmatprep.subr.bf16.mxu0 0
    %113 = vmatpush1.bf16.msra.mxu0 0
    %114 = vmatprep.subr.bf16.mxu0 0
    %115 = vmatpush1.bf16.msra.mxu0 0
    %116 = vmatprep.subr.bf16.mxu0 0
    %117 = vmatpush1.bf16.msra.mxu0 0
    %118 = vmatprep.subr.bf16.mxu0 0
    %119 = vmatpush1.bf16.msra.mxu0 0
    %120 = vmatprep.subr.bf16.mxu0 0
    %121 = vmatpush1.bf16.msra.mxu0 0
    %122 = vmatprep.subr.bf16.mxu0 0
    %123 = vmatpush1.bf16.msra.mxu0 0
    %124 = vmatprep.subr.bf16.mxu0 0
    %125 = vmatpush1.bf16.msra.mxu0 0
    %126 = vmatprep.subr.bf16.mxu0 0
    %127 = vmatpush1.bf16.msra.mxu0 0
    %128 = vmatprep.subr.bf16.mxu0 0
    %129 = vmatpush1.bf16.msra.mxu0 0
    %130 = vmatprep.subr.bf16.mxu0 0
    %131 = vmatpush1.bf16.msra.mxu0 0
    %132 = vmatprep.subr.bf16.mxu0 0
    %133 = vmatpush1.bf16.msra.mxu0 0
    %134 = vmatprep.subr.bf16.mxu0 0
    %135 = vmatpush1.bf16.msra.mxu0 0
    %136 = vmatprep.subr.bf16.mxu0 0
    %137 = vmatpush1.bf16.msra.mxu0 0
    %138 = vmatprep.mubr.bf16.mxu0 0
    %139 = vmatmul.mubr.bf16.gmra.mrb[0].mxu0 %v104
    %v140 = vpop.f32.mrb[0].mxu0
    %v141 = vadd.f32 0.0, %v140
    %v142 = vpop.f32.mrb[0].mxu0
    %v143 = vadd.f32 0.0, %v142
    %v144 = vpop.f32.mrb[0].mxu0
    %v145 = vpop.f32.mrb[0].mxu0
    %146 = vdwg.mxu0
    %147 = vmatprep.subr.bf16.mxu0 %v89
    %148 = vmatpush1.bf16.msra.mxu0 %v88
    %149 = vmatprep.subr.bf16.mxu0 %v93
    %150 = vmatpush1.bf16.msra.mxu0 %v92
    %151 = vmatprep.subr.bf16.mxu0 0
    %152 = vmatpush1.bf16.msra.mxu0 0
    %153 = vmatprep.subr.bf16.mxu0 0
    %154 = vmatpush1.bf16.msra.mxu0 0
    %155 = vmatprep.subr.bf16.mxu0 0
    %156 = vmatpush1.bf16.msra.mxu0 0
    %157 = vmatprep.subr.bf16.mxu0 0
    %158 = vmatpush1.bf16.msra.mxu0 0
    %159 = vmatprep.subr.bf16.mxu0 0
    %160 = vmatpush1.bf16.msra.mxu0 0
    %161 = vmatprep.subr.bf16.mxu0 0
    %162 = vmatpush1.bf16.msra.mxu0 0
    %163 = vmatprep.subr.bf16.mxu0 0
    %164 = vmatpush1.bf16.msra.mxu0 0
    %165 = vmatprep.subr.bf16.mxu0 0
    %166 = vmatpush1.bf16.msra.mxu0 0
    %167 = vmatprep.subr.bf16.mxu0 0
    %168 = vmatpush1.bf16.msra.mxu0 0
    %169 = vmatprep.subr.bf16.mxu0 0
    %170 = vmatpush1.bf16.msra.mxu0 0
    %171 = vmatprep.subr.bf16.mxu0 0
    %172 = vmatpush1.bf16.msra.mxu0 0
    %173 = vmatprep.subr.bf16.mxu0 0
    %174 = vmatpush1.bf16.msra.mxu0 0
    %175 = vmatprep.subr.bf16.mxu0 0
    %176 = vmatpush1.bf16.msra.mxu0 0
    %177 = vmatprep.subr.bf16.mxu0 0
    %178 = vmatpush1.bf16.msra.mxu0 0
    %179 = vmatprep.mubr.bf16.mxu0 0
    %180 = vmatmul.mubr.bf16.gmra.mrb[0].mxu0 %v104
    %v181 = vpop.f32.mrb[0].mxu0
    %v182 = vadd.f32 0.0, %v181
    %v183 = vpop.f32.mrb[0].mxu0
    %v184 = vadd.f32 0.0, %v183
    %v185 = vpop.f32.mrb[0].mxu0
    %v186 = vpop.f32.mrb[0].mxu0
    %187 = vdwg.mxu0
    %v188 = vadd.f32 %v49, %v141
    %v189 = vadd.f32 %v50, %v143
    %v190 = vadd.f32 %v51, %v182
    %v191 = vadd.f32 %v52, %v184
    %192 = vst [vmem:[#allocation2] sm:$0xff] %v188
    %193 = vst [vmem:[#allocation2 + $0x8] sm:$0xff] %v189
    %194 = vst [vmem:[#allocation2 + $0x10] sm:$0xff] %v190
    %195 = vst [vmem:[#allocation2 + $0x18] sm:$0xff] %v191
    // Predicated region
    $region22: #{tpu_custom_call.1} parent=1 // pred_check
      %p196 = pneg %p41
    $region23: #{tpu_custom_call.1} parent=1 // pred_check_branch
      %198 = sbr.rel (%p196) target = $region25
    $region24: #{tpu_custom_call.1} parent=1 // pred_region
      %v199 = vld [vmem:[#allocation2] sm:$0xff]
      %v200 = vld [vmem:[#allocation2 + $0x8] sm:$0xff]
      %v201 = vld [vmem:[#allocation2 + $0x10] sm:$0xff]
      %v202 = vld [vmem:[#allocation2 + $0x18] sm:$0xff]
      %203 = vst [vmem:[#allocation8] sm:$0xff] %v199
      %204 = vst [vmem:[#allocation8 + $0x8] sm:$0xff] %v200
      %205 = vst [vmem:[#allocation8 + $0x10] sm:$0xff] %v201
      %206 = vst [vmem:[#allocation8 + $0x18] sm:$0xff] %v202
      %v207 = vadd.f32 %v199, %v200
      %v208 = vadd.f32 %v207, %v201
      %v209 = vadd.f32 %v208, %v202
      %210 = vadd.xlane.f32.xlu0 %v209
      %v211 = vpop.xlane.xlu0 %210
      %v212 = vmul.f32 %v199, %v199
      %v213 = vmul.f32 %v200, %v200
      %v214 = vmul.f32 %v201, %v201
      %v215 = vmul.f32 %v202, %v202
      %v216 = vadd.f32 %v212, %v213
      %v217 = vadd.f32 %v216, %v214
      %v218 = vadd.f32 %v217, %v215
      %219 = vadd.xlane.f32.xlu0 %v218
      %v220 = vpop.xlane.xlu0 %219
      %vm221 = vcmask 7168
      %v222 = vsel %vm221, %v211, %v220
      %vm223 = vcmask 15360
      %224 = vst.msk [vmem:[%s3] sm:$0xff] %vm223, %v222
    $region25: #{tpu_custom_call.1} parent=1 // pred_fallthru
      _
    // Predicated region
    $region26: #{tpu_custom_call.1} parent=1 // pred_check
      _
    $region27: #{tpu_custom_call.1} parent=1 // pred_check_branch
      %226 = sbr.rel (0) target = $region29
    $region28: #{tpu_custom_call.1} parent=1 // pred_region
      %s228 = ssub.s32 512, 512
      %229 = vsyncadd [#allocation5], %s228
      %s231 = sshll.u32 [#allocation8], 4
      %s232 = int_to_ptr.vmem [resolvable:$true] %s231
      %234 = dma.vmem_to_hbm [thread:$0]  %s232, 512, %s2, [#allocation5]
    $region29: #{tpu_custom_call.1} parent=1 // pred_fallthru
      _
    // Predicated region
    $region30: #{tpu_custom_call.1} parent=1 // pred_check
      _
    $region31: #{tpu_custom_call.1} parent=1 // pred_check_branch
      %236 = sbr.rel (0) target = $region33
    $region32: #{tpu_custom_call.1} parent=1 // pred_region
      _
    $region33: #{tpu_custom_call.1} parent=1 // pred_fallthru
      _
    // Predicated region
    $region34: #{tpu_custom_call.1} parent=1 // pred_check
      _
    $region35: #{tpu_custom_call.1} parent=1 // pred_check_branch
      %238 = sbr.rel (0) target = $region37
    $region36: #{tpu_custom_call.1} parent=1 // pred_region
      %239 = dma.done [#allocation5], 512
    $region37: #{tpu_custom_call.1} parent=1 // pred_fallthru
      _
    // Predicated region
    $region38: #{tpu_custom_call.1} parent=1 // pred_check
      _
    $region39: #{tpu_custom_call.1} parent=1 // pred_check_branch
      %241 = sbr.rel (0) target = $region41
    $region40: #{tpu_custom_call.1} parent=1 // pred_region
      _
    $region41: #{tpu_custom_call.1} parent=1 // pred_fallthru
      _
    %242 = vsyncpa [#allocation4], 1
    %243 = vsyncpa [#allocation7], 1
    %244 = vsyncpa [#allocation5], 1

</llo_original>
